<compile_context>
chip_gen: v6e
topology: v6e:2x2x1
jax: 0.10.0
libtpu: 0.0.40
codegen_flags: <defaults>
</compile_context>

<pallas_src>
import functools

import jax
import jax.numpy as jnp
import numpy as np
from jax import lax
from jax.experimental import pallas as pl
from jax.experimental.pallas import tpu as pltpu

EPS = 1e-5


@functools.lru_cache(maxsize=1)
def _vmem_limit_bytes():
    """Generation-aware VMEM limit: ~48 MiB on v5e/v6e (128 MiB physical), ~38 MiB on v7x
    (64 MiB per TensorCore).  Falls back to a safe value if the query is unavailable."""
    cap = 128 * 1024 * 1024
    try:
        info = pltpu.get_tpu_info()
        c = getattr(info, "vmem_capacity_bytes", None)
        if c:
            cap = int(c)
    except Exception:
        pass
    return max(16 * 1024 * 1024, min((cap * 3) // 5, 48 * 1024 * 1024))


def _pick_batch_block(B, P, H, vmem_limit):
    """Pick bb (batches per tile): big tiles (<=~1024 rows) within the VMEM budget, but at
    least ~4 grid steps when B allows so each v7x TensorCore gets >=2 tiles and single-TC
    chips get real DMA/compute overlap."""
    row_bytes = 12 * H * 4                      # x in/out (double-buffered) + xt/h1/hn/y + slack
    weight_bytes = (3 * H * H + 4 * H) * 4      # w1t + w2t + packed biases, single-buffered
    avail = max(0, vmem_limit - 8 * 1024 * 1024 - weight_bytes)
    rows_by_vmem = avail // row_bytes
    min_steps = min(4, B)
    bb_by_steps = max(1, B // min_steps)
    bb_by_rows = max(1, min(1024, rows_by_vmem) // P)
    return max(1, min(B, bb_by_steps, bb_by_rows))


def _time_fuser_kernel(x_ref, te_ref, lane_ref, w1t_ref, w2t_ref, bias_ref, o_ref):
    bb, P, H = x_ref.shape
    x = x_ref[...].astype(jnp.float32)                          # (bb, P, H)

    # agent mask + per-batch time encoding, applied with one select (no astype*mul)
    p_iota = lax.broadcasted_iota(jnp.int32, (bb, P, 1), 1)
    keep = p_iota < lane_ref[...]                               # (bb, P, 1) bool
    xt = jnp.where(keep, x + te_ref[...], 0.0)                  # (bb, P, H) f32

    # Layout-free reshape: wrapper guarantees P % 8 == 0 (pads otherwise).
    xt2 = xt.reshape(bb * P, H)
    lhs = xt2.astype(w1t_ref.dtype)                             # no-op unless bf16 matmul flag

    b1 = bias_ref[0:1, :]
    ln_g = bias_ref[1:2, :]
    ln_b = bias_ref[2:3, :]
    b2 = bias_ref[3:4, :]

    # MLP_vectornet: Linear -> LayerNorm(eps=1e-5) -> ReLU
    h1 = jnp.dot(lhs, w1t_ref[...], preferred_element_type=jnp.float32) + b1
    mean = jnp.mean(h1, axis=-1, keepdims=True)
    var = jnp.mean(h1 * h1, axis=-1, keepdims=True) - mean * mean   # back-to-back XLU reductions
    hn = (h1 - mean) * lax.rsqrt(var + EPS)                     # rsqrt -> EUP slot
    hn = jnp.maximum(ln_g * hn + ln_b, 0.0)

    # DecoderResCat fc over concat([xt, mlp(xt)]) WITHOUT materialising the concat:
    # static ref slices of the (2H, H) weight are free views.
    y = jnp.dot(lhs, w2t_ref[:H, :], preferred_element_type=jnp.float32)
    y = y + jnp.dot(hn.astype(w2t_ref.dtype), w2t_ref[H:, :],
                    preferred_element_type=jnp.float32)
    y = y + b2

    # residual (torch: hidden_states += hidden_states_time)
    o_ref[...] = (x + y.reshape(bb, P, H)).astype(o_ref.dtype)


@functools.partial(jax.jit, donate_argnums=(0,),
                   static_argnames=("matmul_dtype", "stream_dtype"))
def time_fuser(hidden_states, timestamps, lane_polyline_indexes, params,
               *, matmul_dtype=None, stream_dtype=None):
    """hidden_states: (B,P,H) (donated: updated in place, do NOT reuse the input array);
    timestamps: (B,) f32; lane_polyline_indexes: (B,) int.
    matmul_dtype=jnp.bfloat16  -> bf16 MXU operands, f32 accumulation (~1e-2 tolerance; big v5e win).
    stream_dtype=jnp.bfloat16  -> bf16 HBM streaming of x/out (halves HBM traffic on v6e/v7x)."""
    B, P, H = hidden_states.shape

    vmem_limit = _vmem_limit_bytes()
    bb = _pick_batch_block(B, P, H, vmem_limit)
    num_blocks = pl.cdiv(B, bb)

    x = hidden_states
    if stream_dtype is not None:
        x = x.astype(stream_dtype)

    # Guard the in-kernel (bb,P,H)->(bb*P,H) reshape: layout-free only for P % 8 == 0
    # (f32 sublanes).  Pad P in the wrapper on the rare odd-P path.
    Pk = P if P % 8 == 0 else ((P + 7) // 8) * 8
    if Pk != P:
        x = jnp.pad(x, ((0, 0), (0, Pk - P), (0, 0)))

    # TimeEncode: one cos per (batch, feature); broadcast over P inside the kernel.
    te = jnp.cos(timestamps[:, None].astype(jnp.float32) * params["time_w"][None, :]
                 + params["time_b"][None, :])[:, None, :]            # (B, 1, H) f32
    lane = lane_polyline_indexes.astype(jnp.int32).reshape(B, 1, 1)

    # Ragged grid: pad the tiny per-batch side inputs so out-of-range batches see lane=0
    # (=> fully masked rows); Pallas masks the boundary block of x/out itself.
    Bp = num_blocks * bb
    if Bp != B:
        te = jnp.pad(te, ((0, Bp - B), (0, 0), (0, 0)))
        lane = jnp.pad(lane, ((0, Bp - B), (0, 0), (0, 0)))

    w1t, w2t = params["w1t"], params["w2t"]
    if matmul_dtype is not None:
        w1t = w1t.astype(matmul_dtype)
        w2t = w2t.astype(matmul_dtype)
    bias4 = params["bias4"].astype(jnp.float32)                      # [b1, ln_g, ln_b, b2]

    x_spec = pl.BlockSpec((bb, Pk, H), lambda i: (i, 0, 0))
    te_spec = pl.BlockSpec((bb, 1, H), lambda i: (i, 0, 0))
    lane_spec = pl.BlockSpec((bb, 1, 1), lambda i: (i, 0, 0))
    # Grid-invariant weights/biases: constant index_map + single buffer (no 2x VMEM waste).
    w1_spec = pl.BlockSpec((H, H), lambda i: (0, 0), pipeline_mode=pl.Buffered(1))
    w2_spec = pl.BlockSpec((2 * H, H), lambda i: (0, 0), pipeline_mode=pl.Buffered(1))
    bias_spec = pl.BlockSpec((4, H), lambda i: (0, 0), pipeline_mode=pl.Buffered(1))

    out = pl.pallas_call(
        _time_fuser_kernel,
        out_shape=jax.ShapeDtypeStruct((B, Pk, H), x.dtype),
        grid=(num_blocks,),
        in_specs=[x_spec, te_spec, lane_spec, w1_spec, w2_spec, bias_spec],
        out_specs=x_spec,
        input_output_aliases={0: 0},     # residual update writes back into hidden_states
        compiler_params=pltpu.CompilerParams(
            dimension_semantics=("parallel",),
            vmem_limit_bytes=vmem_limit),
    )(x, te, lane, w1t, w2t, bias4)

    if Pk != P:
        out = out[:, :P, :]
    return out


def init_params(hidden_size, key):
    """Parameters stored in kernel layout: pre-transposed weights, biases/LN packed as (4,H)."""
    H = hidden_size
    k1, k2, k3, k4 = jax.random.split(key, 4)
    # TimeEncode: deterministic frequency weights, zero bias (as in the module).
    time_w = jnp.asarray((1.0 / 10.0 ** np.linspace(0, 9, H)).astype(np.float32))
    w1 = jax.random.normal(k1, (H, H), jnp.float32) * 0.02        # mlp.linear.weight (out, in)
    w2 = jax.random.normal(k3, (H, 2 * H), jnp.float32) * 0.02    # fc.weight (out, 2H) = [x | mlp]
    b1 = jax.random.normal(k2, (H,), jnp.float32) * 0.02
    b2 = jax.random.normal(k4, (H,), jnp.float32) * 0.02
    bias4 = jnp.stack([b1,
                       jnp.ones((H,), jnp.float32),               # LayerNorm weight
                       jnp.zeros((H,), jnp.float32),              # LayerNorm bias
                       b2])
    return {
        "time_w": time_w,                                         # (H,)
        "time_b": jnp.zeros((H,), jnp.float32),
        "w1t": w1.T,                                              # (H, H), pre-transposed once
        "w2t": w2.T,                                              # (2H, H), pre-transposed once
        "bias4": bias4,                                           # (4, H): [b1, ln_g, ln_b, b2]
    }


def reference_jax(hidden_states, timestamps, lane_polyline_indexes, params):
    """Pure-JAX replica of the PyTorch forward, for verification."""
    B, P, H = hidden_states.shape
    te = jnp.cos(timestamps[:, None] * params["time_w"][None, :] + params["time_b"][None, :])
    xt = te[:, None, :] + hidden_states
    mask = (jnp.arange(P)[None, :] < lane_polyline_indexes[:, None]).astype(jnp.float32)
    xt = xt * mask[:, :, None]
    b1, g, beta, b2 = params["bias4"]
    h1 = xt @ params["w1t"] + b1
    u = h1.mean(-1, keepdims=True)
    s = ((h1 - u) ** 2).mean(-1, keepdims=True)
    hn = (h1 - u) / jnp.sqrt(s + EPS)
    hn = jnp.maximum(g * hn + beta, 0.0)
    cat = jnp.concatenate([xt, hn], axis=-1)
    y = cat @ params["w2t"] + b2
    return hidden_states + y


if __name__ == "__main__":
    B, P, H = 2, 8, 128     # batch, polyline_num, hidden_size
    key = jax.random.PRNGKey(0)
    kx, kt, kp = jax.random.split(key, 3)

    hidden_states = jax.random.normal(kx, (B, P, H), jnp.float32)
    timestamps = jax.random.uniform(kt, (B,), jnp.float32, 0.0, 10.0)
    lane_polyline_indexes = jnp.array([3, 6], dtype=jnp.int32)

    params = init_params(H, kp)

    # Compute the reference BEFORE the kernel: hidden_states is donated (in-place update,
    # mirroring the torch module's `hidden_states += ...`).
    ref = jax.block_until_ready(
        reference_jax(hidden_states, timestamps, lane_polyline_indexes, params))

    out = jax.block_until_ready(
        time_fuser(hidden_states, timestamps, lane_polyline_indexes, params))

    np.testing.assert_allclose(np.asarray(out), np.asarray(ref), rtol=2e-5, atol=2e-5)

    print("KERNEL_OK")
</pallas_src>

<mosaic_0001>
module attributes {stable_mosaic.version = 11 : i64} {
  func.func @_time_fuser_kernel(%arg0: i32, %arg1: memref<1x8x128xf32, #tpu.memory_space<vmem>>, %arg2: memref<1x1x128xf32, #tpu.memory_space<vmem>>, %arg3: memref<1x1x1xi32, #tpu.memory_space<vmem>>, %arg4: memref<128x128xf32, #tpu.memory_space<vmem>>, %arg5: memref<256x128xf32, #tpu.memory_space<vmem>>, %arg6: memref<4x128xf32, #tpu.memory_space<vmem>>, %arg7: memref<1x8x128xf32, #tpu.memory_space<vmem>>) attributes {dimension_semantics = [#tpu.dimension_semantics<parallel>], iteration_bounds = array<i64: 2>, scalar_prefetch = 0 : i64, scratch_operands = 0 : i64, tpu.core_type = #tpu.core_type<tc>, window_params = [{transform_indices = @transform_0, window_bounds = array<i64: 1, 8, 128>}, {transform_indices = @transform_1, window_bounds = array<i64: 1, 1, 128>}, {transform_indices = @transform_2, window_bounds = array<i64: 1, 1, 1>}, {pipeline_mode = #tpu.pipeline_mode<synchronous>, transform_indices = @transform_3, window_bounds = array<i64: 128, 128>}, {pipeline_mode = #tpu.pipeline_mode<synchronous>, transform_indices = @transform_4, window_bounds = array<i64: 256, 128>}, {pipeline_mode = #tpu.pipeline_mode<synchronous>, transform_indices = @transform_5, window_bounds = array<i64: 4, 128>}, {transform_indices = @transform_6, window_bounds = array<i64: 1, 8, 128>}]} {
    %c0 = arith.constant 0 : index
    %c0_0 = arith.constant 0 : index
    %c0_1 = arith.constant 0 : index
    %0 = vector.load %arg1[%c0, %c0_0, %c0_1] : memref<1x8x128xf32, #tpu.memory_space<vmem>>, vector<1x8x128xf32>
    %1 = tpu.iota {dimensions = array<i32: 1>} : vector<1x8x1xi32>
    %c0_2 = arith.constant 0 : index
    %c0_3 = arith.constant 0 : index
    %c0_4 = arith.constant 0 : index
    %2 = vector.load %arg3[%c0_2, %c0_3, %c0_4] : memref<1x1x1xi32, #tpu.memory_space<vmem>>, vector<1x1x1xi32>
    %3 = vector.broadcast %2 : vector<1x1x1xi32> to vector<1x8x1xi32>
    %4 = arith.cmpi slt, %1, %3 : vector<1x8x1xi32>
    %c0_5 = arith.constant 0 : index
    %c0_6 = arith.constant 0 : index
    %c0_7 = arith.constant 0 : index
    %5 = vector.load %arg2[%c0_5, %c0_6, %c0_7] : memref<1x1x128xf32, #tpu.memory_space<vmem>>, vector<1x1x128xf32>
    %6 = vector.broadcast %5 : vector<1x1x128xf32> to vector<1x8x128xf32>
    %7 = arith.addf %0, %6 : vector<1x8x128xf32>
    %cst = arith.constant 0.000000e+00 : f32
    %8 = vector.shape_cast %4 : vector<1x8x1xi1> to vector<1x8x1xi1>
    %9 = vector.broadcast %8 : vector<1x8x1xi1> to vector<1x8x128xi1>
    %10 = vector.broadcast %cst : f32 to vector<1x8x128xf32>
    %11 = arith.select %9, %7, %10 : vector<1x8x128xi1>, vector<1x8x128xf32>
    %12 = vector.shape_cast %11 : vector<1x8x128xf32> to vector<8x128xf32>
    %c0_8 = arith.constant 0 : index
    %c0_9 = arith.constant 0 : index
    %13 = vector.load %arg6[%c0_8, %c0_9] : memref<4x128xf32, #tpu.memory_space<vmem>>, vector<1x128xf32>
    %c1 = arith.constant 1 : index
    %c0_10 = arith.constant 0 : index
    %14 = vector.load %arg6[%c1, %c0_10] : memref<4x128xf32, #tpu.memory_space<vmem>>, vector<1x128xf32>
    %c2 = arith.constant 2 : index
    %c0_11 = arith.constant 0 : index
    %15 = vector.load %arg6[%c2, %c0_11] : memref<4x128xf32, #tpu.memory_space<vmem>>, vector<1x128xf32>
    %c3 = arith.constant 3 : index
    %c0_12 = arith.constant 0 : index
    %16 = vector.load %arg6[%c3, %c0_12] : memref<4x128xf32, #tpu.memory_space<vmem>>, vector<1x128xf32>
    %c0_13 = arith.constant 0 : index
    %c0_14 = arith.constant 0 : index
    %17 = vector.load %arg4[%c0_13, %c0_14] : memref<128x128xf32, #tpu.memory_space<vmem>>, vector<128x128xf32>
    %cst_15 = arith.constant dense<0.000000e+00> : vector<8x128xf32>
    %18 = tpu.matmul %12, %17, %cst_15 {dimension_numbers = #tpu.dot_dimension_numbers<[1], [0], [0], [1], [0, 0, 1, 1], [], []>} : vector<8x128xf32>, vector<128x128xf32>, vector<8x128xf32> -> vector<8x128xf32>
    %19 = vector.broadcast %13 : vector<1x128xf32> to vector<8x128xf32>
    %20 = arith.addf %18, %19 : vector<8x128xf32>
    %cst_16 = arith.constant dense<0.000000e+00> : vector<8xf32>
    %21 = vector.multi_reduction <add>, %20, %cst_16 [1] : vector<8x128xf32> to vector<8xf32>
    %22 = vector.shape_cast %21 : vector<8xf32> to vector<8x1xf32>
    %cst_17 = arith.constant 1.280000e+02 : f32
    %23 = vector.broadcast %cst_17 : f32 to vector<8x1xf32>
    %24 = arith.divf %22, %23 : vector<8x1xf32>
    %25 = arith.mulf %20, %20 : vector<8x128xf32>
    %cst_18 = arith.constant dense<0.000000e+00> : vector<8xf32>
    %26 = vector.multi_reduction <add>, %25, %cst_18 [1] : vector<8x128xf32> to vector<8xf32>
    %27 = vector.shape_cast %26 : vector<8xf32> to vector<8x1xf32>
    %cst_19 = arith.constant 1.280000e+02 : f32
    %28 = vector.broadcast %cst_19 : f32 to vector<8x1xf32>
    %29 = arith.divf %27, %28 : vector<8x1xf32>
    %30 = arith.mulf %24, %24 : vector<8x1xf32>
    %31 = arith.subf %29, %30 : vector<8x1xf32>
    %32 = vector.broadcast %24 : vector<8x1xf32> to vector<8x128xf32>
    %33 = arith.subf %20, %32 : vector<8x128xf32>
    %cst_20 = arith.constant 9.99999974E-6 : f32
    %34 = vector.broadcast %cst_20 : f32 to vector<8x1xf32>
    %35 = arith.addf %31, %34 : vector<8x1xf32>
    %36 = math.rsqrt %35 : vector<8x1xf32>
    %37 = vector.broadcast %36 : vector<8x1xf32> to vector<8x128xf32>
    %38 = arith.mulf %33, %37 : vector<8x128xf32>
    %39 = vector.broadcast %14 : vector<1x128xf32> to vector<8x128xf32>
    %40 = arith.mulf %39, %38 : vector<8x128xf32>
    %41 = vector.broadcast %15 : vector<1x128xf32> to vector<8x128xf32>
    %42 = arith.addf %40, %41 : vector<8x128xf32>
    %cst_21 = arith.constant 0.000000e+00 : f32
    %43 = vector.broadcast %cst_21 : f32 to vector<8x128xf32>
    %44 = arith.maximumf %42, %43 : vector<8x128xf32>
    %c0_22 = arith.constant 0 : index
    %c0_23 = arith.constant 0 : index
    %45 = vector.load %arg5[%c0_22, %c0_23] : memref<256x128xf32, #tpu.memory_space<vmem>>, vector<128x128xf32>
    %cst_24 = arith.constant dense<0.000000e+00> : vector<8x128xf32>
    %46 = tpu.matmul %12, %45, %cst_24 {dimension_numbers = #tpu.dot_dimension_numbers<[1], [0], [0], [1], [0, 0, 1, 1], [], []>} : vector<8x128xf32>, vector<128x128xf32>, vector<8x128xf32> -> vector<8x128xf32>
    %c128 = arith.constant 128 : index
    %c0_25 = arith.constant 0 : index
    %47 = vector.load %arg5[%c128, %c0_25] : memref<256x128xf32, #tpu.memory_space<vmem>>, vector<128x128xf32>
    %cst_26 = arith.constant dense<0.000000e+00> : vector<8x128xf32>
    %48 = tpu.matmul %44, %47, %cst_26 {dimension_numbers = #tpu.dot_dimension_numbers<[1], [0], [0], [1], [0, 0, 1, 1], [], []>} : vector<8x128xf32>, vector<128x128xf32>, vector<8x128xf32> -> vector<8x128xf32>
    %49 = arith.addf %46, %48 : vector<8x128xf32>
    %50 = vector.broadcast %16 : vector<1x128xf32> to vector<8x128xf32>
    %51 = arith.addf %49, %50 : vector<8x128xf32>
    %52 = vector.shape_cast %51 : vector<8x128xf32> to vector<1x8x128xf32>
    %53 = arith.addf %0, %52 : vector<1x8x128xf32>
    %c0_27 = arith.constant 0 : index
    %c0_28 = arith.constant 0 : index
    %c0_29 = arith.constant 0 : index
    %54 = vector.load %arg7[%c0_27, %c0_28, %c0_29] : memref<1x8x128xf32, #tpu.memory_space<vmem>>, vector<1x8x128xf32>
    tpu.vector_store %arg7[%c0_27, %c0_28, %c0_29], %53 {strides = array<i32>} : memref<1x8x128xf32, #tpu.memory_space<vmem>>, vector<1x8x128xf32>,
    return
  }
  func.func @transform_0(%arg0: i32) -> (i32, i32, i32) {
    %c0_i32 = arith.constant 0 : i32
    %c0_i32_0 = arith.constant 0 : i32
    %c0_i32_1 = arith.constant 0 : i32
    return %arg0, %c0_i32, %c0_i32_0 : i32, i32, i32
  }
  func.func @transform_1(%arg0: i32) -> (i32, i32, i32) {
    %c0_i32 = arith.constant 0 : i32
    %c0_i32_0 = arith.constant 0 : i32
    %c0_i32_1 = arith.constant 0 : i32
    return %arg0, %c0_i32, %c0_i32_0 : i32, i32, i32
  }
  func.func @transform_2(%arg0: i32) -> (i32, i32, i32) {
    %c0_i32 = arith.constant 0 : i32
    %c0_i32_0 = arith.constant 0 : i32
    %c0_i32_1 = arith.constant 0 : i32
    return %arg0, %c0_i32, %c0_i32_0 : i32, i32, i32
  }
  func.func @transform_3(%arg0: i32) -> (i32, i32) {
    %c0_i32 = arith.constant 0 : i32
    %c0_i32_0 = arith.constant 0 : i32
    %c0_i32_1 = arith.constant 0 : i32
    return %c0_i32, %c0_i32_0 : i32, i32
  }
  func.func @transform_4(%arg0: i32) -> (i32, i32) {
    %c0_i32 = arith.constant 0 : i32
    %c0_i32_0 = arith.constant 0 : i32
    %c0_i32_1 = arith.constant 0 : i32
    return %c0_i32, %c0_i32_0 : i32, i32
  }
  func.func @transform_5(%arg0: i32) -> (i32, i32) {
    %c0_i32 = arith.constant 0 : i32
    %c0_i32_0 = arith.constant 0 : i32
    %c0_i32_1 = arith.constant 0 : i32
    return %c0_i32, %c0_i32_0 : i32, i32
  }
  func.func @transform_6(%arg0: i32) -> (i32, i32, i32) {
    %c0_i32 = arith.constant 0 : i32
    %c0_i32_0 = arith.constant 0 : i32
    %c0_i32_1 = arith.constant 0 : i32
    return %arg0, %c0_i32, %c0_i32_0 : i32, i32, i32
  }
}

</mosaic_0001>

<llo_original>
// kernel: time_fuser.1
$region0: #{time_fuser.1}
  #allocation0 [shape = 'u32[]', space=smem, size = 0x4, offset = 0x4, fixed_abs, tag = 'smem constant byte address 0x4 - core index']
  #allocation1 [shape = 'u32[144,128]{1,0:T(1,128)}', space=vmem, size = 0x12000, scoped, tag = 'internal scratch']
  %s0 = inlined_call_operand.hbm [shape: f32[2,8,128], index: 0, kind: input, shape index: {}, may-alias: {0,6}]
  %s1 = inlined_call_operand.vmem [shape: f32[2,1,128], index: 1, kind: input, shape index: {}]
  %s2 = inlined_call_operand.vmem [shape: s32[2,1,1], index: 2, kind: input, shape index: {}]
  %s3 = inlined_call_operand.hbm [shape: f32[128,128], index: 3, kind: input, shape index: {}]
  %s4 = inlined_call_operand.hbm [shape: f32[256,128], index: 4, kind: input, shape index: {}]
  %s5 = inlined_call_operand.vmem [shape: f32[4,128], index: 5, kind: input, shape index: {}]
  %s6 = inlined_call_operand.hbm [shape: f32[2,8,128], index: 6, kind: output, shape index: {}, may-alias: {0,6}]
  %s7 = sld [smem:[#allocation0]]
  $region69: #{time_fuser.1} parent=0
    _
  %s9 = ssub.s32 1, %s7
  %s10 = scalar_select 0, %s9, %s7
  $region1: #{time_fuser.1} parent=0
    #allocation2 [shape = 'u8[8192]{0}', space=vmem, size = 0x2000, scoped, tag = 'input window, operand 0']
    #allocation3 [shape = 's32[2]{0}', space=sflag, size = 0x8, scoped, tag = 'scoped memory for time_fuser.1']
    #allocation4 [shape = 's32[2]{0}', space=sflag, size = 0x8, scoped, tag = 'scoped memory for time_fuser.1']
    #allocation5 [shape = 'u8[65536]{0}', space=vmem, size = 0x10000, scoped, tag = 'input window, operand 3, single buffered']
    #allocation6 [shape = 's32[1]{0}', space=sflag, size = 0x4, scoped, tag = 'scoped memory for time_fuser.1']
    #allocation7 [shape = 'u8[131072]{0}', space=vmem, size = 0x20000, scoped, tag = 'input window, operand 4, single buffered']
    #allocation8 [shape = 'u8[8192]{0}', space=vmem, size = 0x2000, scoped, tag = 'output window, operand 0']
    %11 = vsyncpa [#allocation3], 0
    %s12 = scalar_lea.sflag [#allocation3], 1
    %13 = vsyncpa %s12, 0
    %14 = vsyncpa [#allocation6], 0
    %15 = vsyncpa [#allocation4], 0
    %s16 = scalar_lea.sflag [#allocation4], 1
    %17 = vsyncpa %s16, 0
    loop: start=0, step=1, limit=4
    $region2: #{time_fuser.1} parent=1 // loop_pre_header
      _
    $region3: #{time_fuser.1} parent=1 // loop_header
      %s19 = sphi 0, %s23
      %p20 = scmp.ge.s32.totalorder %s19, 4
      %s29 = sphi 0, %s31
      %s32 = sphi 0, %s29
      %s33 = sphi 0, %s32
      %s49 = sphi 0, %s33
      %s55 = sphi 0, %s57
      %s58 = sphi 0, %s55
      %s59 = sphi 0, %s58
      %s75 = sphi 0, %s59
      %s81 = sphi 0, %s83
      %s84 = sphi 0, %s81
      %s85 = sphi 0, %s84
      %s101 = sphi 0, %s85
      %s105 = sphi 0, %s105
      %s107 = sphi 0, %s105
      %s108 = sphi 0, %s107
      %s122 = sphi 0, %s108
      %s126 = sphi 0, %s126
      %s128 = sphi 0, %s126
      %s129 = sphi 0, %s128
      %s143 = sphi 0, %s129
      %s147 = sphi 0, %s147
      %s149 = sphi 0, %s147
      %s150 = sphi 0, %s149
      %s164 = sphi 0, %s150
      %s170 = sphi 0, %s172
      %s173 = sphi 0, %s170
      %s174 = sphi 0, %s173
      %s190 = sphi 0, %s174
    $region4: #{time_fuser.1} parent=1 // loop_header_branch
      %22 = sbr.rel (%p20) target = $region8
    $region5: #{time_fuser.1} parent=1 // loop_body
      %s24 = ssub.s32 %s19, 1
      %s25 = ssub.s32 %s19, 2
      %s26 = sadd.s32 %s19, 1
      %s27 = ssub.s32 %s19, %s26
      %p28 = scmp.eq.s32.totalorder %s27, 0
      %s30 = sadd.s32 %s29, 1
      %s31 = scalar_select %p28, %s29, %s30
      %p34 = pneg %p28
      %p35 = scmp.eq.s32.totalorder %s19, 1
      %p36 = por %p34, %p35
      %p37 = scmp.ne.s32.totalorder %s29, %s32
      %p38 = scmp.eq.s32.totalorder %s19, 0
      %p39 = por %p37, %p38
      %p40 = scmp.ne.s32.totalorder %s29, %s32
      %p41 = scmp.eq.s32.totalorder %s24, 1
      %p42 = por %p40, %p41
      %p43 = scmp.ne.s32.totalorder %s32, %s33
      %p44 = scmp.eq.s32.totalorder %s24, 0
      %p45 = por %p43, %p44
      %p46 = scmp.ne.s32.totalorder %s32, %s33
      %p47 = scmp.eq.s32.totalorder %s25, 1
      %p48 = por %p46, %p47
      %p50 = scmp.ne.s32.totalorder %s33, %s49
      %p51 = scmp.eq.s32.totalorder %s25, 0
      %p52 = por %p50, %p51
      %s53 = ssub.s32 %s19, %s26
      %p54 = scmp.eq.s32.totalorder %s53, 0
      %s56 = sadd.s32 %s55, 1
      %s57 = scalar_select %p54, %s55, %s56
      %p60 = pneg %p54
      %p61 = scmp.eq.s32.totalorder %s19, 1
      %p62 = por %p60, %p61
      %p63 = scmp.ne.s32.totalorder %s55, %s58
      %p64 = scmp.eq.s32.totalorder %s19, 0
      %p65 = por %p63, %p64
      %p66 = scmp.ne.s32.totalorder %s55, %s58
      %p67 = scmp.eq.s32.totalorder %s24, 1
      %p68 = por %p66, %p67
      %p69 = scmp.ne.s32.totalorder %s58, %s59
      %p70 = scmp.eq.s32.totalorder %s24, 0
      %p71 = por %p69, %p70
      %p72 = scmp.ne.s32.totalorder %s58, %s59
      %p73 = scmp.eq.s32.totalorder %s25, 1
      %p74 = por %p72, %p73
      %p76 = scmp.ne.s32.totalorder %s59, %s75
      %p77 = scmp.eq.s32.totalorder %s25, 0
      %p78 = por %p76, %p77
      %s79 = ssub.s32 %s19, %s26
      %p80 = scmp.eq.s32.totalorder %s79, 0
      %s82 = sadd.s32 %s81, 1
      %s83 = scalar_select %p80, %s81, %s82
      %p86 = pneg %p80
      %p87 = scmp.eq.s32.totalorder %s19, 1
      %p88 = por %p86, %p87
      %p89 = scmp.ne.s32.totalorder %s81, %s84
      %p90 = scmp.eq.s32.totalorder %s19, 0
      %p91 = por %p89, %p90
      %p92 = scmp.ne.s32.totalorder %s81, %s84
      %p93 = scmp.eq.s32.totalorder %s24, 1
      %p94 = por %p92, %p93
      %p95 = scmp.ne.s32.totalorder %s84, %s85
      %p96 = scmp.eq.s32.totalorder %s24, 0
      %p97 = por %p95, %p96
      %p98 = scmp.ne.s32.totalorder %s84, %s85
      %p99 = scmp.eq.s32.totalorder %s25, 1
      %p100 = por %p98, %p99
      %p102 = scmp.ne.s32.totalorder %s85, %s101
      %p103 = scmp.eq.s32.totalorder %s25, 0
      %p104 = por %p102, %p103
      %s106 = sadd.s32 %s105, 1
      %p109 = scmp.eq.s32.totalorder %s19, 1
      %p110 = scmp.ne.s32.totalorder %s105, %s107
      %p111 = scmp.eq.s32.totalorder %s19, 0
      %p112 = por %p110, %p111
      %p113 = scmp.ne.s32.totalorder %s105, %s107
      %p114 = scmp.eq.s32.totalorder %s24, 1
      %p115 = por %p113, %p114
      %p116 = scmp.ne.s32.totalorder %s107, %s108
      %p117 = scmp.eq.s32.totalorder %s24, 0
      %p118 = por %p116, %p117
      %p119 = scmp.ne.s32.totalorder %s107, %s108
      %p120 = scmp.eq.s32.totalorder %s25, 1
      %p121 = por %p119, %p120
      %p123 = scmp.ne.s32.totalorder %s108, %s122
      %p124 = scmp.eq.s32.totalorder %s25, 0
      %p125 = por %p123, %p124
      %s127 = sadd.s32 %s126, 1
      %p130 = scmp.eq.s32.totalorder %s19, 1
      %p131 = scmp.ne.s32.totalorder %s126, %s128
      %p132 = scmp.eq.s32.totalorder %s19, 0
      %p133 = por %p131, %p132
      %p134 = scmp.ne.s32.totalorder %s126, %s128
      %p135 = scmp.eq.s32.totalorder %s24, 1
      %p136 = por %p134, %p135
      %p137 = scmp.ne.s32.totalorder %s128, %s129
      %p138 = scmp.eq.s32.totalorder %s24, 0
      %p139 = por %p137, %p138
      %p140 = scmp.ne.s32.totalorder %s128, %s129
      %p141 = scmp.eq.s32.totalorder %s25, 1
      %p142 = por %p140, %p141
      %p144 = scmp.ne.s32.totalorder %s129, %s143
      %p145 = scmp.eq.s32.totalorder %s25, 0
      %p146 = por %p144, %p145
      %s148 = sadd.s32 %s147, 1
      %p151 = scmp.eq.s32.totalorder %s19, 1
      %p152 = scmp.ne.s32.totalorder %s147, %s149
      %p153 = scmp.eq.s32.totalorder %s19, 0
      %p154 = por %p152, %p153
      %p155 = scmp.ne.s32.totalorder %s147, %s149
      %p156 = scmp.eq.s32.totalorder %s24, 1
      %p157 = por %p155, %p156
      %p158 = scmp.ne.s32.totalorder %s149, %s150
      %p159 = scmp.eq.s32.totalorder %s24, 0
      %p160 = por %p158, %p159
      %p161 = scmp.ne.s32.totalorder %s149, %s150
      %p162 = scmp.eq.s32.totalorder %s25, 1
      %p163 = por %p161, %p162
      %p165 = scmp.ne.s32.totalorder %s150, %s164
      %p166 = scmp.eq.s32.totalorder %s25, 0
      %p167 = por %p165, %p166
      %s168 = ssub.s32 %s19, %s26
      %p169 = scmp.eq.s32.totalorder %s168, 0
      %s171 = sadd.s32 %s170, 1
      %s172 = scalar_select %p169, %s170, %s171
      %p175 = pneg %p169
      %p176 = scmp.eq.s32.totalorder %s19, 1
      %p177 = por %p175, %p176
      %p178 = scmp.ne.s32.totalorder %s170, %s173
      %p179 = scmp.eq.s32.totalorder %s19, 0
      %p180 = por %p178, %p179
      %p181 = scmp.ne.s32.totalorder %s170, %s173
      %p182 = scmp.eq.s32.totalorder %s24, 1
      %p183 = por %p181, %p182
      %p184 = scmp.ne.s32.totalorder %s173, %s174
      %p185 = scmp.eq.s32.totalorder %s24, 0
      %p186 = por %p184, %p185
      %p187 = scmp.ne.s32.totalorder %s173, %s174
      %p188 = scmp.eq.s32.totalorder %s25, 1
      %p189 = por %p187, %p188
      %p191 = scmp.ne.s32.totalorder %s174, %s190
      %p192 = scmp.eq.s32.totalorder %s25, 0
      %p193 = por %p191, %p192
      %p194 = scmp.le.s32.totalorder 1, %s19
      %p195 = scmp.lt.s32.totalorder %s19, 3
      %p196 = pnand %p194, %p195
      %p197 = pneg %p196
      // Predicated region
      $region9: #{time_fuser.1} parent=5 // pred_check
        _
      $region10: #{time_fuser.1} parent=5 // pred_check_branch
        %199 = sbr.rel (%p196) target = $region12
      $region11: #{time_fuser.1} parent=5 // pred_region
        %s200 = ssub.s32 %s19, 1
        // Predicated region
        $region13: #{time_fuser.1} parent=11 // pred_check
          %p201 = pneg %p118
        $region14: #{time_fuser.1} parent=11 // pred_check_branch
          %203 = sbr.rel (%p201) target = $region16
        $region15: #{time_fuser.1} parent=11 // pred_region
          %s205 = ssub.s32 2048, 2048
          %206 = vsyncadd [#allocation6], %s205
          %s207 = sshll.u32 [#allocation5], 4
          %s208 = int_to_ptr.vmem [resolvable:$true] %s207
          %213 = dma.hbm_to_vmem [thread:$0]  %s3, 2048, %s208, [#allocation6], 128, 128, 8
        $region16: #{time_fuser.1} parent=11 // pred_fallthru
          _
        // Predicated region
        $region17: #{time_fuser.1} parent=11 // pred_check
          %p214 = pneg %p139
        $region18: #{time_fuser.1} parent=11 // pred_check_branch
          %216 = sbr.rel (%p214) target = $region20
        $region19: #{time_fuser.1} parent=11 // pred_region
          %s218 = ssub.s32 4096, 4096
          %219 = vsyncadd [#allocation6], %s218
          %s220 = sshll.u32 [#allocation7], 4
          %s221 = int_to_ptr.vmem [resolvable:$true] %s220
          %226 = dma.hbm_to_vmem [thread:$0]  %s4, 4096, %s221, [#allocation6], 128, 128, 8
        $region20: #{time_fuser.1} parent=11 // pred_fallthru
          _
        // Predicated region
        $region21: #{time_fuser.1} parent=11 // pred_check
          %p227 = pneg %p160
        $region22: #{time_fuser.1} parent=11 // pred_check_branch
          %229 = sbr.rel (%p227) target = $region24
        $region23: #{time_fuser.1} parent=11 // pred_region
          _
        $region24: #{time_fuser.1} parent=11 // pred_fallthru
          _
      $region12: #{time_fuser.1} parent=5 // pred_fallthru
        _
      %p230 = scmp.lt.s32.totalorder %s19, 2
      // Predicated region
      $region25: #{time_fuser.1} parent=5 // pred_check
        %p231 = pneg %p230
      $region26: #{time_fuser.1} parent=5 // pred_check_branch
        %233 = sbr.rel (%p231) target = $region28
      $region27: #{time_fuser.1} parent=5 // pred_region
        // Predicated region
        $region29: #{time_fuser.1} parent=27 // pred_check
          %p234 = pneg %p39
        $region30: #{time_fuser.1} parent=27 // pred_check_branch
          %236 = sbr.rel (%p234) target = $region32
        $region31: #{time_fuser.1} parent=27 // pred_region
          %s237 = sand.u32 %s29, 1
          %s238 = scalar_lea.sflag [#allocation3], %s237
          %s239 = sand.u32 %s29, 1
          %s240 = smul.addr %s239, 8
          %s241 = scalar_lea.vmem [#allocation2], %s240
          %s243 = ssub.s32 128, 128
          %244 = vsyncadd %s238, %s243
          %s245 = smul.addr %s19, 128
          %s246 = scalar_lea.hbm %s0, %s245
          %s248 = sshll.u32 %s241, 4
          %s249 = int_to_ptr.vmem [resolvable:$true] %s248
          %251 = dma.hbm_to_vmem [thread:$0]  %s246, 128, %s249, %s238
        $region32: #{time_fuser.1} parent=27 // pred_fallthru
          _
        // Predicated region
        $region33: #{time_fuser.1} parent=27 // pred_check
          %p252 = pneg %p65
        $region34: #{time_fuser.1} parent=27 // pred_check_branch
          %254 = sbr.rel (%p252) target = $region36
        $region35: #{time_fuser.1} parent=27 // pred_region
          %p255 = scmp.lt.s32.totalorder %s19, 1
          %s256 = scalar_select %p255, %s19, 1
          %s257 = scalar_lea.vmem %s1, %s256
        $region36: #{time_fuser.1} parent=27 // pred_fallthru
          _
        // Predicated region
        $region37: #{time_fuser.1} parent=27 // pred_check
          %p258 = pneg %p91
        $region38: #{time_fuser.1} parent=27 // pred_check_branch
          %260 = sbr.rel (%p258) target = $region40
        $region39: #{time_fuser.1} parent=27 // pred_region
          %p261 = scmp.lt.s32.totalorder %s19, 1
          %s262 = scalar_select %p261, %s19, 1
          %s263 = scalar_lea.vmem %s2, %s262
        $region40: #{time_fuser.1} parent=27 // pred_fallthru
          _
      $region28: #{time_fuser.1} parent=5 // pred_fallthru
        _
      %p264 = scmp.le.s32.totalorder 1, %s19
      %p265 = scmp.lt.s32.totalorder %s19, 3
      %p266 = pnand %p264, %p265
      %p267 = pneg %p266
      // Predicated region
      $region41: #{time_fuser.1} parent=5 // pred_check
        _
      $region42: #{time_fuser.1} parent=5 // pred_check_branch
        %269 = sbr.rel (%p266) target = $region44
      $region43: #{time_fuser.1} parent=5 // pred_region
        %s270 = ssub.s32 %s19, 1
        %s271 = sand.u32 %s32, 1
        %s272 = scalar_lea.sflag [#allocation3], %s271
        %s273 = sand.u32 %s32, 1
        %s274 = smul.addr %s273, 8
        %s275 = scalar_lea.vmem [#allocation2], %s274
        // Predicated region
        $region45: #{time_fuser.1} parent=43 // pred_check
          %p276 = pneg %p45
        $region46: #{time_fuser.1} parent=43 // pred_check_branch
          %278 = sbr.rel (%p276) target = $region48
        $region47: #{time_fuser.1} parent=43 // pred_region
          %279 = dma.done %s272, 128
        $region48: #{time_fuser.1} parent=43 // pred_fallthru
          _
        // Predicated region
        $region49: #{time_fuser.1} parent=43 // pred_check
          %p280 = pneg %p118
        $region50: #{time_fuser.1} parent=43 // pred_check_branch
          %282 = sbr.rel (%p280) target = $region52
        $region51: #{time_fuser.1} parent=43 // pred_region
          %283 = dma.done [#allocation6], 2048
        $region52: #{time_fuser.1} parent=43 // pred_fallthru
          _
        // Predicated region
        $region53: #{time_fuser.1} parent=43 // pred_check
          %p284 = pneg %p139
        $region54: #{time_fuser.1} parent=43 // pred_check_branch
          %286 = sbr.rel (%p284) target = $region56
        $region55: #{time_fuser.1} parent=43 // pred_region
          %287 = dma.done [#allocation6], 4096
        $region56: #{time_fuser.1} parent=43 // pred_fallthru
          _
        %s288 = sand.u32 %s32, 1
        %s289 = scalar_lea.sflag [#allocation3], %s288
        %s290 = sand.u32 %s32, 1
        %s291 = smul.addr %s290, 8
        %s292 = scalar_lea.vmem [#allocation2], %s291
        %p293 = pneg %p45
        %p294 = pneg %p42
        %p295 = scmp.lt.s32.totalorder %s24, 1
        %s296 = scalar_select %p295, %s24, 1
        %s297 = scalar_lea.vmem %s1, %s296
        %p298 = pneg %p71
        %p299 = pneg %p68
        %p300 = scmp.lt.s32.totalorder %s24, 1
        %s301 = scalar_select %p300, %s24, 1
        %s302 = scalar_lea.vmem %s2, %s301
        %p303 = pneg %p97
        %p304 = pneg %p94
        %p305 = pneg %p118
        %p306 = pneg %p115
        %p307 = pneg %p139
        %p308 = pneg %p136
        %p309 = pneg %p160
        %p310 = pneg %p157
        %p311 = pneg %p186
        %p312 = pneg %p183
        %s313 = sand.u32 %s173, 1
        %s314 = scalar_lea.sflag [#allocation4], %s313
        %s315 = sand.u32 %s173, 1
        %s316 = smul.addr %s315, 8
        %s317 = scalar_lea.vmem [#allocation8], %s316
        %p318 = scmp.lt.s32.totalorder %s24, 1
        %s319 = scalar_select %p318, %s24, 1
        %s320 = scalar_lea.vmem %s1, %s319
        %p321 = scmp.lt.s32.totalorder %s24, 1
        %s322 = scalar_select %p321, %s24, 1
        %s323 = scalar_lea.vmem %s2, %s322
        %v324 = vld [vmem:[%s275] sm:$0xff]
        %v325 = vlaneseq
        %v326 = vshrl.u32 %v325, 7
        %v327 = vld [vmem:[%s323] sm:$0x1]
        %v328 = vlaneseq
        %v329 = vshrl.u32 %v328, 7
        %v330 = vsub.s32 0, %v329
        %v331 = vrot.slane %v327, %v330
        %vm332 = vcmp.lt.s32.totalorder %v326, %v331
        %v333 = vld [vmem:[%s320] sm:$0x1]
        %v335 = vlaneseq
        %v336 = vshrl.u32 %v335, 7
        %v337 = vsub.s32 0, %v336
        %v338 = vrot.slane %v333, %v337
        %v340 = vadd.f32 %v324, %v338
        %v341 = vsel %vm332, 1, 0
        %342 = vset.pattern.permute.xlu0 0
        %343 = vperm.xlu0 %342, %v341
        %v344 = vpop.permute.xlu0 %343
        %vm345 = vcmp.eq.s32.totalorder %v344, 1
        %v346 = vsel %vm345, %v340, 0.0
        %v347 = vld [vmem:[%s5] sm:$0x1]
        %v348 = vld [vmem:[%s5 + $0x1] sm:$0x1]
        %v349 = vld [vmem:[%s5 + $0x2] sm:$0x1]
        %v350 = vld [vmem:[%s5 + $0x3] sm:$0x1]
        %v351 = vld [vmem:[#allocation5] sm:$0xff]
        %v352 = vld [vmem:[#allocation5 + $0x8] sm:$0xff]
        %v353 = vld [vmem:[#allocation5 + $0x10] sm:$0xff]
        %v354 = vld [vmem:[#allocation5 + $0x18] sm:$0xff]
        %v355 = vld [vmem:[#allocation5 + $0x20] sm:$0xff]
        %v356 = vld [vmem:[#allocation5 + $0x28] sm:$0xff]
        %v357 = vld [vmem:[#allocation5 + $0x30] sm:$0xff]
        %v358 = vld [vmem:[#allocation5 + $0x38] sm:$0xff]
        %v359 = vld [vmem:[#allocation5 + $0x40] sm:$0xff]
        %v360 = vld [vmem:[#allocation5 + $0x48] sm:$0xff]
        %v361 = vld [vmem:[#allocation5 + $0x50] sm:$0xff]
        %v362 = vld [vmem:[#allocation5 + $0x58] sm:$0xff]
        %v363 = vld [vmem:[#allocation5 + $0x60] sm:$0xff]
        %v364 = vld [vmem:[#allocation5 + $0x68] sm:$0xff]
        %v365 = vld [vmem:[#allocation5 + $0x70] sm:$0xff]
        %v366 = vld [vmem:[#allocation5 + $0x78] sm:$0xff]
        %v367 = vlaneseq
        %v368 = vshrl.u32 %v367, 7
        %v369 = vsub.s32 0, %v368
        %v370 = vrot.slane %v347, %v369
        %371 = vmatprep.subr.mxu0 0.0
        %372 = vmatpush1.msra.mxu0 %v366
        %373 = vmatprep.subr.mxu0 0.0
        %374 = vmatpush1.msra.mxu0 %v365
        %375 = vmatprep.subr.mxu0 0.0
        %376 = vmatpush1.msra.mxu0 %v364
        %377 = vmatprep.subr.mxu0 0.0
        %378 = vmatpush1.msra.mxu0 %v363
        %379 = vmatprep.subr.mxu0 0.0
        %380 = vmatpush1.msra.mxu0 %v362
        %381 = vmatprep.subr.mxu0 0.0
        %382 = vmatpush1.msra.mxu0 %v361
        %383 = vmatprep.subr.mxu0 0.0
        %384 = vmatpush1.msra.mxu0 %v360
        %385 = vmatprep.subr.mxu0 0.0
        %386 = vmatpush1.msra.mxu0 %v359
        %387 = vmatprep.subr.mxu0 0.0
        %388 = vmatpush1.msra.mxu0 %v358
        %389 = vmatprep.subr.mxu0 0.0
        %390 = vmatpush1.msra.mxu0 %v357
        %391 = vmatprep.subr.mxu0 0.0
        %392 = vmatpush1.msra.mxu0 %v356
        %393 = vmatprep.subr.mxu0 0.0
        %394 = vmatpush1.msra.mxu0 %v355
        %395 = vmatprep.subr.mxu0 0.0
        %396 = vmatpush1.msra.mxu0 %v354
        %397 = vmatprep.subr.mxu0 0.0
        %398 = vmatpush1.msra.mxu0 %v353
        %399 = vmatprep.subr.mxu0 0.0
        %400 = vmatpush1.msra.mxu0 %v352
        %401 = vmatprep.subr.mxu0 0.0
        %402 = vmatpush1.msra.mxu0 %v351
        %403 = vmatprep.subr.mxu0 0.0
        %404 = vmatpush2.msra.mxu0 0.0
        %405 = vmatprep.subr.mxu0 0.0
        %406 = vmatpush2.msra.mxu0 0.0
        %407 = vmatprep.subr.mxu0 0.0
        %408 = vmatpush2.msra.mxu0 0.0
        %409 = vmatprep.subr.mxu0 0.0
        %410 = vmatpush2.msra.mxu0 0.0
        %411 = vmatprep.subr.mxu0 0.0
        %412 = vmatpush2.msra.mxu0 0.0
        %413 = vmatprep.subr.mxu0 0.0
        %414 = vmatpush2.msra.mxu0 0.0
        %415 = vmatprep.subr.mxu0 0.0
        %416 = vmatpush2.msra.mxu0 0.0
        %417 = vmatprep.subr.mxu0 0.0
        %418 = vmatpush2.msra.mxu0 0.0
        %419 = vmatprep.subr.mxu0 0.0
        %420 = vmatpush2.msra.mxu0 0.0
        %421 = vmatprep.subr.mxu0 0.0
        %422 = vmatpush2.msra.mxu0 0.0
        %423 = vmatprep.subr.mxu0 0.0
        %424 = vmatpush2.msra.mxu0 0.0
        %425 = vmatprep.subr.mxu0 0.0
        %426 = vmatpush2.msra.mxu0 0.0
        %427 = vmatprep.subr.mxu0 0.0
        %428 = vmatpush2.msra.mxu0 0.0
        %429 = vmatprep.subr.mxu0 0.0
        %430 = vmatpush2.msra.mxu0 0.0
        %431 = vmatprep.subr.mxu0 0.0
        %432 = vmatpush2.msra.mxu0 0.0
        %433 = vmatprep.subr.mxu0 0.0
        %434 = vmatpush2.msra.mxu0 0.0
        %435 = vmatprep.mubr.f32.mxu0 0.0
        %436 = vmatmul.mubr.f32.gmra.mxu0 %v346
        %v437 = vpop.f32.mrf.mxu0
        %v438 = vadd.f32 %v370, %v437
        %v439 = vpop.f32.mrf.mxu0
        %440 = vdwg.mxu0
        %441 = vadd.xlane.f32.xlu0 %v438
        %v442 = vpop.xlane.xlu0 %441
        %v443 = vrcp.pop 128.0
        %v444 = vmul.f32 %v442, %v443
        %v445 = vmul.f32 %v438, %v438
        %446 = vadd.xlane.f32.xlu0 %v445
        %v447 = vpop.xlane.xlu0 %446
        %v448 = vmul.f32 %v447, %v443
        %v449 = vmul.f32 %v444, %v444
        %v450 = vsub.f32 %v448, %v449
        %v451 = vsub.f32 %v438, %v444
        %v452 = vadd.f32 %v450, 1e-05
        %v453 = vrsqrt.pop %v452
        %v454 = vmul.f32 %v451, %v453
        %v455 = vlaneseq
        %v456 = vshrl.u32 %v455, 7
        %v457 = vsub.s32 0, %v456
        %v458 = vrot.slane %v348, %v457
        %v459 = vmul.f32 %v458, %v454
        %v460 = vlaneseq
        %v461 = vshrl.u32 %v460, 7
        %v462 = vsub.s32 0, %v461
        %v463 = vrot.slane %v349, %v462
        %v464 = vadd.f32 %v459, %v463
        %v465 = vmax.f32 %v464, 0.0
        %v466 = vld [vmem:[#allocation7] sm:$0xff]
        %v467 = vld [vmem:[#allocation7 + $0x8] sm:$0xff]
        %v468 = vld [vmem:[#allocation7 + $0x10] sm:$0xff]
        %v469 = vld [vmem:[#allocation7 + $0x18] sm:$0xff]
        %v470 = vld [vmem:[#allocation7 + $0x20] sm:$0xff]
        %v471 = vld [vmem:[#allocation7 + $0x28] sm:$0xff]
        %v472 = vld [vmem:[#allocation7 + $0x30] sm:$0xff]
        %v473 = vld [vmem:[#allocation7 + $0x38] sm:$0xff]
        %v474 = vld [vmem:[#allocation7 + $0x40] sm:$0xff]
        %v475 = vld [vmem:[#allocation7 + $0x48] sm:$0xff]
        %v476 = vld [vmem:[#allocation7 + $0x50] sm:$0xff]
        %v477 = vld [vmem:[#allocation7 + $0x58] sm:$0xff]
        %v478 = vld [vmem:[#allocation7 + $0x60] sm:$0xff]
        %v479 = vld [vmem:[#allocation7 + $0x68] sm:$0xff]
        %v480 = vld [vmem:[#allocation7 + $0x70] sm:$0xff]
        %v481 = vld [vmem:[#allocation7 + $0x78] sm:$0xff]
        %v482 = vld [vmem:[#allocation7 + $0x80] sm:$0xff]
        %v483 = vld [vmem:[#allocation7 + $0x88] sm:$0xff]
        %v484 = vld [vmem:[#allocation7 + $0x90] sm:$0xff]
        %v485 = vld [vmem:[#allocation7 + $0x98] sm:$0xff]
        %v486 = vld [vmem:[#allocation7 + $0xa0] sm:$0xff]
        %v487 = vld [vmem:[#allocation7 + $0xa8] sm:$0xff]
        %v488 = vld [vmem:[#allocation7 + $0xb0] sm:$0xff]
        %v489 = vld [vmem:[#allocation7 + $0xb8] sm:$0xff]
        %v490 = vld [vmem:[#allocation7 + $0xc0] sm:$0xff]
        %v491 = vld [vmem:[#allocation7 + $0xc8] sm:$0xff]
        %v492 = vld [vmem:[#allocation7 + $0xd0] sm:$0xff]
        %v493 = vld [vmem:[#allocation7 + $0xd8] sm:$0xff]
        %v494 = vld [vmem:[#allocation7 + $0xe0] sm:$0xff]
        %v495 = vld [vmem:[#allocation7 + $0xe8] sm:$0xff]
        %v496 = vld [vmem:[#allocation7 + $0xf0] sm:$0xff]
        %v497 = vld [vmem:[#allocation7 + $0xf8] sm:$0xff]
        %498 = vmatprep.subr.mxu0 0.0
        %499 = vmatpush1.msra.mxu0 %v497
        %500 = vmatprep.subr.mxu0 0.0
        %501 = vmatpush1.msra.mxu0 %v496
        %502 = vmatprep.subr.mxu0 0.0
        %503 = vmatpush1.msra.mxu0 %v495
        %504 = vmatprep.subr.mxu0 0.0
        %505 = vmatpush1.msra.mxu0 %v494
        %506 = vmatprep.subr.mxu0 0.0
        %507 = vmatpush1.msra.mxu0 %v493
        %508 = vmatprep.subr.mxu0 0.0
        %509 = vmatpush1.msra.mxu0 %v492
        %510 = vmatprep.subr.mxu0 0.0
        %511 = vmatpush1.msra.mxu0 %v491
        %512 = vmatprep.subr.mxu0 0.0
        %513 = vmatpush1.msra.mxu0 %v490
        %514 = vmatprep.subr.mxu0 0.0
        %515 = vmatpush1.msra.mxu0 %v489
        %516 = vmatprep.subr.mxu0 0.0
        %517 = vmatpush1.msra.mxu0 %v488
        %518 = vmatprep.subr.mxu0 0.0
        %519 = vmatpush1.msra.mxu0 %v487
        %520 = vmatprep.subr.mxu0 0.0
        %521 = vmatpush1.msra.mxu0 %v486
        %522 = vmatprep.subr.mxu0 0.0
        %523 = vmatpush1.msra.mxu0 %v485
        %524 = vmatprep.subr.mxu0 0.0
        %525 = vmatpush1.msra.mxu0 %v484
        %526 = vmatprep.subr.mxu0 0.0
        %527 = vmatpush1.msra.mxu0 %v483
        %528 = vmatprep.subr.mxu0 0.0
        %529 = vmatpush1.msra.mxu0 %v482
        %530 = vmatprep.subr.mxu0 0.0
        %531 = vmatpush2.msra.mxu0 0.0
        %532 = vmatprep.subr.mxu0 0.0
        %533 = vmatpush2.msra.mxu0 0.0
        %534 = vmatprep.subr.mxu0 0.0
        %535 = vmatpush2.msra.mxu0 0.0
        %536 = vmatprep.subr.mxu0 0.0
        %537 = vmatpush2.msra.mxu0 0.0
        %538 = vmatprep.subr.mxu0 0.0
        %539 = vmatpush2.msra.mxu0 0.0
        %540 = vmatprep.subr.mxu0 0.0
        %541 = vmatpush2.msra.mxu0 0.0
        %542 = vmatprep.subr.mxu0 0.0
        %543 = vmatpush2.msra.mxu0 0.0
        %544 = vmatprep.subr.mxu0 0.0
        %545 = vmatpush2.msra.mxu0 0.0
        %546 = vmatprep.subr.mxu0 0.0
        %547 = vmatpush2.msra.mxu0 0.0
        %548 = vmatprep.subr.mxu0 0.0
        %549 = vmatpush2.msra.mxu0 0.0
        %550 = vmatprep.subr.mxu0 0.0
        %551 = vmatpush2.msra.mxu0 0.0
        %552 = vmatprep.subr.mxu0 0.0
        %553 = vmatpush2.msra.mxu0 0.0
        %554 = vmatprep.subr.mxu0 0.0
        %555 = vmatpush2.msra.mxu0 0.0
        %556 = vmatprep.subr.mxu0 0.0
        %557 = vmatpush2.msra.mxu0 0.0
        %558 = vmatprep.subr.mxu0 0.0
        %559 = vmatpush2.msra.mxu0 0.0
        %560 = vmatprep.subr.mxu0 0.0
        %561 = vmatpush2.msra.mxu0 0.0
        %562 = vmatprep.mubr.f32.mxu0 0.0
        %563 = vmatmul.mubr.f32.gmra.mxu0 %v465
        %v564 = vpop.f32.mrf.mxu0
        %v565 = vadd.f32 0.0, %v564
        %v566 = vpop.f32.mrf.mxu0
        %567 = vdwg.mxu0
        %568 = vmatprep.subr.mxu0 0.0
        %569 = vmatpush1.msra.mxu0 %v481
        %570 = vmatprep.subr.mxu0 0.0
        %571 = vmatpush1.msra.mxu0 %v480
        %572 = vmatprep.subr.mxu0 0.0
        %573 = vmatpush1.msra.mxu0 %v479
        %574 = vmatprep.subr.mxu0 0.0
        %575 = vmatpush1.msra.mxu0 %v478
        %576 = vmatprep.subr.mxu0 0.0
        %577 = vmatpush1.msra.mxu0 %v477
        %578 = vmatprep.subr.mxu0 0.0
        %579 = vmatpush1.msra.mxu0 %v476
        %580 = vmatprep.subr.mxu0 0.0
        %581 = vmatpush1.msra.mxu0 %v475
        %582 = vmatprep.subr.mxu0 0.0
        %583 = vmatpush1.msra.mxu0 %v474
        %584 = vmatprep.subr.mxu0 0.0
        %585 = vmatpush1.msra.mxu0 %v473
        %586 = vmatprep.subr.mxu0 0.0
        %587 = vmatpush1.msra.mxu0 %v472
        %588 = vmatprep.subr.mxu0 0.0
        %589 = vmatpush1.msra.mxu0 %v471
        %590 = vmatprep.subr.mxu0 0.0
        %591 = vmatpush1.msra.mxu0 %v470
        %592 = vmatprep.subr.mxu0 0.0
        %593 = vmatpush1.msra.mxu0 %v469
        %594 = vmatprep.subr.mxu0 0.0
        %595 = vmatpush1.msra.mxu0 %v468
        %596 = vmatprep.subr.mxu0 0.0
        %597 = vmatpush1.msra.mxu0 %v467
        %598 = vmatprep.subr.mxu0 0.0
        %599 = vmatpush1.msra.mxu0 %v466
        %600 = vmatprep.subr.mxu0 0.0
        %601 = vmatpush2.msra.mxu0 0.0
        %602 = vmatprep.subr.mxu0 0.0
        %603 = vmatpush2.msra.mxu0 0.0
        %604 = vmatprep.subr.mxu0 0.0
        %605 = vmatpush2.msra.mxu0 0.0
        %606 = vmatprep.subr.mxu0 0.0
        %607 = vmatpush2.msra.mxu0 0.0
        %608 = vmatprep.subr.mxu0 0.0
        %609 = vmatpush2.msra.mxu0 0.0
        %610 = vmatprep.subr.mxu0 0.0
        %611 = vmatpush2.msra.mxu0 0.0
        %612 = vmatprep.subr.mxu0 0.0
        %613 = vmatpush2.msra.mxu0 0.0
        %614 = vmatprep.subr.mxu0 0.0
        %615 = vmatpush2.msra.mxu0 0.0
        %616 = vmatprep.subr.mxu0 0.0
        %617 = vmatpush2.msra.mxu0 0.0
        %618 = vmatprep.subr.mxu0 0.0
        %619 = vmatpush2.msra.mxu0 0.0
        %620 = vmatprep.subr.mxu0 0.0
        %621 = vmatpush2.msra.mxu0 0.0
        %622 = vmatprep.subr.mxu0 0.0
        %623 = vmatpush2.msra.mxu0 0.0
        %624 = vmatprep.subr.mxu0 0.0
        %625 = vmatpush2.msra.mxu0 0.0
        %626 = vmatprep.subr.mxu0 0.0
        %627 = vmatpush2.msra.mxu0 0.0
        %628 = vmatprep.subr.mxu0 0.0
        %629 = vmatpush2.msra.mxu0 0.0
        %630 = vmatprep.subr.mxu0 0.0
        %631 = vmatpush2.msra.mxu0 0.0
        %632 = vmatprep.mubr.f32.mxu0 0.0
        %633 = vmatmul.mubr.f32.gmra.mxu0 %v346
        %v634 = vpop.f32.mrf.mxu0
        %v635 = vadd.f32 %v565, %v634
        %v636 = vpop.f32.mrf.mxu0
        %637 = vdwg.mxu0
        %v638 = vlaneseq
        %v639 = vshrl.u32 %v638, 7
        %v640 = vsub.s32 0, %v639
        %v641 = vrot.slane %v350, %v640
        %v642 = vadd.f32 %v635, %v641
        %v643 = vadd.f32 %v324, %v642
        %644 = vst [vmem:[%s317] sm:$0xff] %v643
        %s645 = sand.u32 %s173, 1
        %s646 = scalar_lea.sflag [#allocation4], %s645
        %s647 = sand.u32 %s173, 1
        %s648 = smul.addr %s647, 8
        %s649 = scalar_lea.vmem [#allocation8], %s648
        // Predicated region
        $region57: #{time_fuser.1} parent=43 // pred_check
          %p650 = pneg %p183
        $region58: #{time_fuser.1} parent=43 // pred_check_branch
          %652 = sbr.rel (%p650) target = $region60
        $region59: #{time_fuser.1} parent=43 // pred_region
          %s654 = ssub.s32 128, 128
          %655 = vsyncadd %s646, %s654
          %s656 = smul.addr %s24, 128
          %s657 = scalar_lea.hbm %s6, %s656
          %s659 = sshll.u32 %s649, 4
          %s660 = int_to_ptr.vmem [resolvable:$true] %s659
          %662 = dma.vmem_to_hbm [thread:$0]  %s660, 128, %s657, %s646
        $region60: #{time_fuser.1} parent=43 // pred_fallthru
          _
      $region44: #{time_fuser.1} parent=5 // pred_fallthru
        _
      %p663 = scmp.le.s32.totalorder 2, %s19
      // Predicated region
      $region61: #{time_fuser.1} parent=5 // pred_check
        %p664 = pneg %p663
      $region62: #{time_fuser.1} parent=5 // pred_check_branch
        %666 = sbr.rel (%p664) target = $region64
      $region63: #{time_fuser.1} parent=5 // pred_region
        %s667 = ssub.s32 %s19, 2
        // Predicated region
        $region65: #{time_fuser.1} parent=63 // pred_check
          %p668 = pneg %p189
        $region66: #{time_fuser.1} parent=63 // pred_check_branch
          %670 = sbr.rel (%p668) target = $region68
        $region67: #{time_fuser.1} parent=63 // pred_region
          %s671 = sand.u32 %s174, 1
          %s672 = scalar_lea.sflag [#allocation4], %s671
          %s673 = sand.u32 %s174, 1
          %s674 = smul.addr %s673, 8
          %s675 = scalar_lea.vmem [#allocation8], %s674
          %676 = dma.done %s672, 128
        $region68: #{time_fuser.1} parent=63 // pred_fallthru
          _
      $region64: #{time_fuser.1} parent=5 // pred_fallthru
        _
    $region6: #{time_fuser.1} parent=1 // loop_footer
      %s23 = sadd.s32 1, %s19
    $region7: #{time_fuser.1} parent=1 // loop_footer_branch
      %18 = sbr.rel target = $region3
    $region8: #{time_fuser.1} parent=1 // loop_exit
      _
    %677 = vsyncpa [#allocation3], 1
    %s678 = scalar_lea.sflag [#allocation3], 1
    %679 = vsyncpa %s678, 1
    %680 = vsyncpa [#allocation6], 1
    %681 = vsyncpa [#allocation4], 1
    %s682 = scalar_lea.sflag [#allocation4], 1
    %683 = vsyncpa %s682, 1

</llo_original>
